<compile_context>
chip_gen: v7x
topology: tpu7x:2x2x1
jax: 0.10.0
libtpu: 0.0.40
codegen_flags: <defaults>
</compile_context>

<pallas_src>
import functools

import jax
import jax.numpy as jnp
from jax.experimental import pallas as pl
from jax.experimental.pallas import tpu as pltpu

LANE_W = 512           # lanes per row (multiple of 128) -> lane-dense output
SUBLANE = 8            # sublane alignment for f32
MAX_BLOCK_ROWS = 256   # 256 * 512 * 4 B = 512 KiB per VMEM buffer
SMALL_NNZ_FASTPATH = 1024  # below this, plain XLA beats a kernel launch


def _round_up(x, m):
    return ((x + m - 1) // m) * m


# ----------------------------- kernels --------------------------------------


def _dropout_kernel_hwprng(seed_ref, vals_ref, out_ref, *, threshold, scale):
    """TPU path: draw bits from the hardware PRNG for the current block."""
    # Mix the grid index into the seed so every block gets distinct bits.
    pltpu.prng_seed(seed_ref[0] + pl.program_id(0))
    bits = pltpu.bitcast(pltpu.prng_random_bits(vals_ref.shape), jnp.uint32)
    keep = bits >= jnp.uint32(threshold)          # P(keep) = 1 - p
    out_ref[...] = jnp.where(keep, vals_ref[...] * jnp.float32(scale),
                             jnp.zeros_like(vals_ref[...]))


def _dropout_kernel_bits(bits_ref, vals_ref, out_ref, *, threshold, scale):
    """Portable path: bits precomputed with jax.random, streamed per block."""
    keep = bits_ref[...] >= jnp.uint32(threshold)  # P(keep) = 1 - p
    out_ref[...] = jnp.where(keep, vals_ref[...] * jnp.float32(scale),
                             jnp.zeros_like(vals_ref[...]))


# ----------------------------- wrappers --------------------------------------


def _padded_layout(nnz):
    rows = max(1, pl.cdiv(nnz, LANE_W))
    rows = _round_up(rows, SUBLANE)                # sublane-aligned slab
    block_rows = min(MAX_BLOCK_ROWS, rows)
    rows = _round_up(rows, block_rows)             # grid divides evenly
    return rows, block_rows


def _dropout_values_pallas(values, p, seed):
    """Inverted dropout on a 1-D values vector via a tiled Pallas kernel."""
    nnz = values.shape[0]
    rows, block_rows = _padded_layout(nnz)
    nnz_pad = rows * LANE_W

    vals_2d = jnp.pad(values.astype(jnp.float32),
                      (0, nnz_pad - nnz)).reshape(rows, LANE_W)

    threshold = min(int(round(p * (1 << 32))), (1 << 32) - 1)
    scale = 1.0 / (1.0 - p)

    grid = (rows // block_rows,)
    tile_spec = pl.BlockSpec((block_rows, LANE_W), lambda i: (i, 0))
    out_shape = jax.ShapeDtypeStruct((rows, LANE_W), jnp.float32)

    if jax.default_backend() == "tpu":
        # Hardware PRNG in-kernel: only vals are read, only out is written.
        kernel = functools.partial(_dropout_kernel_hwprng,
                                   threshold=threshold, scale=scale)
        seed_arr = jnp.asarray([seed], dtype=jnp.int32)
        out_2d = pl.pallas_call(
            kernel,
            out_shape=out_shape,
            grid=grid,
            in_specs=[
                pl.BlockSpec(memory_space=pltpu.SMEM),  # seed scalar
                tile_spec,                               # values tile
            ],
            out_specs=tile_spec,
            compiler_params=pltpu.CompilerParams(
                dimension_semantics=("parallel",)),      # 2 TCs on v7x
        )(seed_arr, vals_2d)
    else:
        # Non-TPU backend (e.g. CPU interpret): pltpu.prng_seed has no
        # lowering there, so feed precomputed random bits through a tile spec.
        bits_2d = jax.random.bits(jax.random.PRNGKey(seed),
                                  (rows, LANE_W), dtype=jnp.uint32)
        kernel = functools.partial(_dropout_kernel_bits,
                                   threshold=threshold, scale=scale)
        out_2d = pl.pallas_call(
            kernel,
            out_shape=out_shape,
            grid=grid,
            in_specs=[tile_spec, tile_spec],
            out_specs=tile_spec,
        )(bits_2d, vals_2d)

    return out_2d.reshape(nnz_pad)[:nnz]


def _dropout_values_xla(values, p, seed):
    """Small-nnz fast path: plain XLA dropout (no kernel-launch overhead)."""
    keep = jax.random.bernoulli(jax.random.PRNGKey(seed), 1.0 - p, values.shape)
    return jnp.where(keep, values.astype(jnp.float32) * (1.0 / (1.0 - p)), 0.0)


class SparseDropout:
    """JAX/Pallas analogue of the PyTorch SparseDropout module.

    Sparse tensor = (indices [2, nnz] int32, values [nnz] f32, dense_shape).
    Only the values go through the hot-path kernel; indices/shape pass through.
    """

    def __init__(self, p, min_pallas_nnz=SMALL_NNZ_FASTPATH):
        self.p = float(p)
        self.min_pallas_nnz = int(min_pallas_nnz)
        self.training = True

    def __call__(self, indices, values, dense_shape, seed=0):
        if (not self.training) or self.p == 0.0:
            drop_vals = values.astype(jnp.float32)
        elif self.p >= 1.0:
            drop_vals = jnp.zeros(values.shape, jnp.float32)
        elif values.shape[0] < self.min_pallas_nnz:
            drop_vals = _dropout_values_xla(values, self.p, seed)
        else:
            drop_vals = _dropout_values_pallas(values, self.p, seed)
        return indices, drop_vals, dense_shape


def _densify(indices, values, dense_shape):
    dense = jnp.zeros(dense_shape, jnp.float32)
    return dense.at[indices[0], indices[1]].add(values)


if __name__ == "__main__":
    key = jax.random.PRNGKey(0)
    k_idx, k_val = jax.random.split(key)

    # Sparse matrix: dense shape (256, 256) with nnz = 8192 unique entries
    # (large enough to exercise the Pallas path).
    dense_shape = (256, 256)
    nnz = 8192
    flat = jax.random.choice(
        k_idx, dense_shape[0] * dense_shape[1], shape=(nnz,), replace=False)
    indices = jnp.stack(
        [flat // dense_shape[1], flat % dense_shape[1]]).astype(jnp.int32)
    values = jax.random.normal(k_val, (nnz,), dtype=jnp.float32)

    module = SparseDropout(p=0.5)
    out_idx, out_vals, out_shape = module(indices, values, dense_shape, seed=0)
    out_vals = jax.block_until_ready(out_vals)

    assert out_idx.shape == indices.shape
    assert out_vals.shape == values.shape

    # Inverted-dropout semantics: survivors equal original * 1/(1-p).
    scale = 1.0 / (1.0 - module.p)
    kept = out_vals != 0.0
    assert bool(jnp.allclose(jnp.where(kept, out_vals, 0.0),
                             jnp.where(kept, values * scale, 0.0),
                             rtol=1e-5, atol=1e-5)), \
        "surviving values not scaled correctly"
    frac_kept = float(jnp.mean(kept.astype(jnp.float32)))
    assert 0.35 < frac_kept < 0.65, f"keep fraction {frac_kept} far from 1-p"

    # Eval mode is identity on the values.
    module.training = False
    _, eval_vals, _ = module(indices, values, dense_shape, seed=0)
    eval_vals = jax.block_until_ready(eval_vals)
    assert bool(jnp.allclose(eval_vals, values)), \
        "eval-mode dropout must be identity"
    module.training = True

    # Tiny-nnz fast path (no Pallas launch) still returns the right shape.
    _, tiny_out, _ = module(indices[:, :64], values[:64], dense_shape, seed=1)
    tiny_out = jax.block_until_ready(tiny_out)
    assert tiny_out.shape == (64,)

    # Densify once to exercise the full sparse-tensor reconstruction path.
    dense_out = jax.block_until_ready(_densify(out_idx, out_vals, out_shape))
    assert dense_out.shape == dense_shape

    print("KERNEL_OK")
</pallas_src>

<mosaic_0001>
module attributes {stable_mosaic.version = 11 : i64} {
  func.func @_dropout_kernel_bits(%arg0: i32, %arg1: memref<16x512xi32, #tpu.memory_space<vmem>>, %arg2: memref<16x512xf32, #tpu.memory_space<vmem>>, %arg3: memref<16x512xf32, #tpu.memory_space<vmem>>) attributes {dimension_semantics = [#tpu.dimension_semantics<arbitrary>], iteration_bounds = array<i64: 1>, scalar_prefetch = 0 : i64, scratch_operands = 0 : i64, tpu.core_type = #tpu.core_type<tc>, window_params = [{transform_indices = @transform_0, window_bounds = array<i64: 16, 512>}, {transform_indices = @transform_1, window_bounds = array<i64: 16, 512>}, {transform_indices = @transform_2, window_bounds = array<i64: 16, 512>}]} {
    %c0 = arith.constant 0 : index
    %c0_0 = arith.constant 0 : index
    %0 = vector.load %arg1[%c0, %c0_0] : memref<16x512xi32, #tpu.memory_space<vmem>>, vector<16x512xi32>
    %c-2147483648_i32 = arith.constant -2147483648 : i32
    %1 = vector.broadcast %c-2147483648_i32 : i32 to vector<16x512xi32>
    %2 = arith.cmpi uge, %0, %1 : vector<16x512xi32>
    %c0_1 = arith.constant 0 : index
    %c0_2 = arith.constant 0 : index
    %3 = vector.load %arg2[%c0_1, %c0_2] : memref<16x512xf32, #tpu.memory_space<vmem>>, vector<16x512xf32>
    %cst = arith.constant 2.000000e+00 : f32
    %4 = vector.broadcast %cst : f32 to vector<16x512xf32>
    %5 = arith.mulf %3, %4 : vector<16x512xf32>
    %cst_3 = arith.constant 0.000000e+00 : f32
    %6 = vector.broadcast %cst_3 : f32 to vector<16x512xf32>
    %7 = arith.select %2, %5, %6 : vector<16x512xi1>, vector<16x512xf32>
    %c0_4 = arith.constant 0 : index
    %c0_5 = arith.constant 0 : index
    %8 = vector.load %arg3[%c0_4, %c0_5] : memref<16x512xf32, #tpu.memory_space<vmem>>, vector<16x512xf32>
    tpu.vector_store %arg3[%c0_4, %c0_5], %7 {strides = array<i32>} : memref<16x512xf32, #tpu.memory_space<vmem>>, vector<16x512xf32>,
    return
  }
  func.func @transform_0(%arg0: i32) -> (i32, i32) {
    %c0_i32 = arith.constant 0 : i32
    %c0_i32_0 = arith.constant 0 : i32
    return %arg0, %c0_i32 : i32, i32
  }
  func.func @transform_1(%arg0: i32) -> (i32, i32) {
    %c0_i32 = arith.constant 0 : i32
    %c0_i32_0 = arith.constant 0 : i32
    return %arg0, %c0_i32 : i32, i32
  }
  func.func @transform_2(%arg0: i32) -> (i32, i32) {
    %c0_i32 = arith.constant 0 : i32
    %c0_i32_0 = arith.constant 0 : i32
    return %arg0, %c0_i32 : i32, i32
  }
}

</mosaic_0001>

<llo_original>
// kernel: tpu_custom_call.1
$region0: #{tpu_custom_call.1}
  #allocation0 [shape = 'u32[]', space=smem, size = 0x4, offset = 0x4, fixed_abs, tag = 'smem constant byte address 0x4 - core index']
  #allocation1 [shape = 'u32[144,128]{1,0:T(1,128)}', space=vmem, size = 0x12000, scoped, tag = 'internal scratch']
  %s0 = inlined_call_operand.hbm [shape: u32[16,512], index: 0, kind: input, shape index: {}]
  %s1 = inlined_call_operand.hbm [shape: f32[16,512], index: 1, kind: input, shape index: {}]
  %s2 = inlined_call_operand.hbm [shape: f32[16,512], index: 2, kind: output, shape index: {}]
  %s3 = sld [smem:[#allocation0]]
  $region26: #{tpu_custom_call.1} parent=0
    _
  %s5 = ssub.s32 1, %s3
  %s6 = scalar_select 0, %s5, %s3
  $region1: #{tpu_custom_call.1} parent=0
    #allocation2 [shape = 'u8[32768]{0}', space=vmem, size = 0x8000, scoped, tag = 'input window, operand 0, single buffered']
    #allocation3 [shape = 's32[1]{0}', space=sflag, size = 0x4, scoped, tag = 'scoped memory for tpu_custom_call.1']
    #allocation4 [shape = 's32[1]{0}', space=sflag, size = 0x4, scoped, tag = 'scoped memory for tpu_custom_call.1']
    #allocation5 [shape = 'u8[32768]{0}', space=vmem, size = 0x8000, scoped, tag = 'input window, operand 1, single buffered']
    #allocation6 [shape = 's32[1]{0}', space=sflag, size = 0x4, scoped, tag = 'scoped memory for tpu_custom_call.1']
    #allocation7 [shape = 'u8[32768]{0}', space=vmem, size = 0x8000, scoped, tag = 'output window, operand 0, single buffered']
    %7 = vsyncpa [#allocation3], 0
    %8 = vsyncpa [#allocation6], 0
    %9 = vsyncpa [#allocation4], 0
    // Predicated region
    $region2: #{tpu_custom_call.1} parent=1 // pred_check
      _
    $region3: #{tpu_custom_call.1} parent=1 // pred_check_branch
      %11 = sbr.rel (0) target = $region5
    $region4: #{tpu_custom_call.1} parent=1 // pred_region
      %s13 = ssub.s32 1024, 1024
      %14 = vsyncadd [#allocation3], %s13
      %s15 = sshll.u32 [#allocation2], 4
      %s16 = int_to_ptr.vmem [resolvable:$true] %s15
      %21 = dma.hbm_to_vmem [thread:$0]  %s0, 1024, %s16, [#allocation3], 512, 512, 32
    $region5: #{tpu_custom_call.1} parent=1 // pred_fallthru
      _
    // Predicated region
    $region6: #{tpu_custom_call.1} parent=1 // pred_check
      _
    $region7: #{tpu_custom_call.1} parent=1 // pred_check_branch
      %23 = sbr.rel (0) target = $region9
    $region8: #{tpu_custom_call.1} parent=1 // pred_region
      %s25 = ssub.s32 1024, 1024
      %26 = vsyncadd [#allocation6], %s25
      %s27 = sshll.u32 [#allocation5], 4
      %s28 = int_to_ptr.vmem [resolvable:$true] %s27
      %33 = dma.hbm_to_vmem [thread:$0]  %s1, 1024, %s28, [#allocation6], 512, 512, 32
    $region9: #{tpu_custom_call.1} parent=1 // pred_fallthru
      _
    // Predicated region
    $region10: #{tpu_custom_call.1} parent=1 // pred_check
      _
    $region11: #{tpu_custom_call.1} parent=1 // pred_check_branch
      %35 = sbr.rel (0) target = $region13
    $region12: #{tpu_custom_call.1} parent=1 // pred_region
      %36 = dma.done [#allocation3], 1024
    $region13: #{tpu_custom_call.1} parent=1 // pred_fallthru
      _
    // Predicated region
    $region14: #{tpu_custom_call.1} parent=1 // pred_check
      _
    $region15: #{tpu_custom_call.1} parent=1 // pred_check_branch
      %38 = sbr.rel (0) target = $region17
    $region16: #{tpu_custom_call.1} parent=1 // pred_region
      %39 = dma.done [#allocation6], 1024
    $region17: #{tpu_custom_call.1} parent=1 // pred_fallthru
      _
    %v40 = vld [vmem:[#allocation2] sm:$0xff]
    %v41 = vld [vmem:[#allocation2 + $0x8] sm:$0xff]
    %v42 = vld [vmem:[#allocation2 + $0x10] sm:$0xff]
    %v43 = vld [vmem:[#allocation2 + $0x18] sm:$0xff]
    %v44 = vld [vmem:[#allocation2 + $0x20] sm:$0xff]
    %v45 = vld [vmem:[#allocation2 + $0x28] sm:$0xff]
    %v46 = vld [vmem:[#allocation2 + $0x30] sm:$0xff]
    %v47 = vld [vmem:[#allocation2 + $0x38] sm:$0xff]
    %vm48 = vcmp.ge.u32.totalorder %v40, 2147483648
    %vm49 = vcmp.ge.u32.totalorder %v41, 2147483648
    %vm50 = vcmp.ge.u32.totalorder %v42, 2147483648
    %vm51 = vcmp.ge.u32.totalorder %v43, 2147483648
    %vm52 = vcmp.ge.u32.totalorder %v44, 2147483648
    %vm53 = vcmp.ge.u32.totalorder %v45, 2147483648
    %vm54 = vcmp.ge.u32.totalorder %v46, 2147483648
    %vm55 = vcmp.ge.u32.totalorder %v47, 2147483648
    %v56 = vld [vmem:[#allocation5] sm:$0xff]
    %v57 = vld [vmem:[#allocation5 + $0x8] sm:$0xff]
    %v58 = vld [vmem:[#allocation5 + $0x10] sm:$0xff]
    %v59 = vld [vmem:[#allocation5 + $0x18] sm:$0xff]
    %v60 = vld [vmem:[#allocation5 + $0x20] sm:$0xff]
    %v61 = vld [vmem:[#allocation5 + $0x28] sm:$0xff]
    %v62 = vld [vmem:[#allocation5 + $0x30] sm:$0xff]
    %v63 = vld [vmem:[#allocation5 + $0x38] sm:$0xff]
    %v64 = vmul.f32 %v56, 2.0
    %v65 = vmul.f32 %v57, 2.0
    %v66 = vmul.f32 %v58, 2.0
    %v67 = vmul.f32 %v59, 2.0
    %v68 = vmul.f32 %v60, 2.0
    %v69 = vmul.f32 %v61, 2.0
    %v70 = vmul.f32 %v62, 2.0
    %v71 = vmul.f32 %v63, 2.0
    %v72 = vsel %vm48, %v64, 0.0
    %v73 = vsel %vm49, %v65, 0.0
    %v74 = vsel %vm50, %v66, 0.0
    %v75 = vsel %vm51, %v67, 0.0
    %v76 = vsel %vm52, %v68, 0.0
    %v77 = vsel %vm53, %v69, 0.0
    %v78 = vsel %vm54, %v70, 0.0
    %v79 = vsel %vm55, %v71, 0.0
    %80 = vst [vmem:[#allocation7] sm:$0xff] %v72
    %81 = vst [vmem:[#allocation7 + $0x8] sm:$0xff] %v73
    %82 = vst [vmem:[#allocation7 + $0x10] sm:$0xff] %v74
    %83 = vst [vmem:[#allocation7 + $0x18] sm:$0xff] %v75
    %84 = vst [vmem:[#allocation7 + $0x20] sm:$0xff] %v76
    %85 = vst [vmem:[#allocation7 + $0x28] sm:$0xff] %v77
    %86 = vst [vmem:[#allocation7 + $0x30] sm:$0xff] %v78
    %87 = vst [vmem:[#allocation7 + $0x38] sm:$0xff] %v79
    // Predicated region
    $region18: #{tpu_custom_call.1} parent=1 // pred_check
      _
    $region19: #{tpu_custom_call.1} parent=1 // pred_check_branch
      %89 = sbr.rel (0) target = $region21
    $region20: #{tpu_custom_call.1} parent=1 // pred_region
      %s91 = ssub.s32 1024, 1024
      %92 = vsyncadd [#allocation4], %s91
      %s93 = sshll.u32 [#allocation7], 4
      %s94 = int_to_ptr.vmem [resolvable:$true] %s93
      %99 = dma.vmem_to_hbm [thread:$0]  %s94, 1024, %s2, [#allocation4], 512, 512, 32
    $region21: #{tpu_custom_call.1} parent=1 // pred_fallthru
      _
    // Predicated region
    $region22: #{tpu_custom_call.1} parent=1 // pred_check
      _
    $region23: #{tpu_custom_call.1} parent=1 // pred_check_branch
      %101 = sbr.rel (0) target = $region25
    $region24: #{tpu_custom_call.1} parent=1 // pred_region
      %102 = dma.done [#allocation4], 1024
    $region25: #{tpu_custom_call.1} parent=1 // pred_fallthru
      _
    %103 = vsyncpa [#allocation3], 1
    %104 = vsyncpa [#allocation6], 1
    %105 = vsyncpa [#allocation4], 1

</llo_original>
